<compile_context>
chip_gen: v7x
topology: tpu7x:2x2x1
jax: 0.10.0
libtpu: 0.0.40
codegen_flags: <defaults>
</compile_context>

<pallas_src>
import jax
import jax.numpy as jnp
from jax.experimental import pallas as pl
from jax.experimental.pallas import tpu as pltpu


def _round_up(x, m):
    return (x + m - 1) // m * m


def _adapter_bias_kernel(x_ref, w_ref, v_ref, b_ref, o_ref):
    # x_ref: (tm, D)  activation tile (input dtype)
    # w_ref: (1, D)   alpha weight row (f32)
    # v_ref: (1, D)   adapter vector row (f32)
    # b_ref: (1, 1)   alpha bias scalar (f32, SMEM)
    # o_ref: (tm, D)
    x = x_ref[...].astype(jnp.float32)
    w = w_ref[...]                                   # (1, D)
    v = v_ref[...]                                   # (1, D)
    b = b_ref[0, 0]                                  # scalar
    alpha = jnp.sum(x * w, axis=-1, keepdims=True) + b   # (tm, 1)
    o_ref[...] = (alpha * v).astype(o_ref.dtype)


def adapter_bias_forward(x, adapter_vector, alpha_weight, alpha_bias, *, tm=512):
    """AdapterBias forward.

    x:              (..., D)
    adapter_vector: (D,)      -- self.adapter_vector
    alpha_weight:   (1, D)    -- self.adapter_alpha.weight (torch layout)
    alpha_bias:     (1,)      -- self.adapter_alpha.bias
    """
    orig_shape = x.shape
    D = orig_shape[-1]
    x2d = x.reshape(-1, D)
    M = x2d.shape[0]
    itemsize = x2d.dtype.itemsize

    # Cap the row tile so x/out double buffers (~4 * tm * D * itemsize) stay
    # comfortably inside the v7x 32 MiB default scoped VMEM (v5e/v6e have more).
    vmem_budget = 16 * 1024 * 1024
    tm_cap = max(8, (vmem_budget // (4 * D * itemsize)) // 8 * 8)
    tm = max(8, min(tm, tm_cap))

    # Balanced tiling of the row axis; keep >= 2 tiles when there is enough
    # work so the second v7x TensorCore is used (harmless on v5e/v6e).
    n_tiles = pl.cdiv(M, tm)
    if M >= 16:
        n_tiles = max(n_tiles, 2)
    tm_eff = max(8, _round_up(pl.cdiv(M, n_tiles), 8))
    grid = (pl.cdiv(M, tm_eff),)

    w_row = alpha_weight.reshape(1, D).astype(jnp.float32)
    v_row = adapter_vector.reshape(1, D).astype(jnp.float32)
    b_arr = alpha_bias.reshape(1, 1).astype(jnp.float32)

    cost = pl.CostEstimate(
        flops=4 * M * D,
        transcendentals=0,
        bytes_accessed=2 * M * D * itemsize + 2 * D * 4 + 4,
    )

    out = pl.pallas_call(
        _adapter_bias_kernel,
        out_shape=jax.ShapeDtypeStruct((M, D), x.dtype),
        grid_spec=pltpu.PrefetchScalarGridSpec(
            num_scalar_prefetch=0,
            grid=grid,
            in_specs=[
                pl.BlockSpec((tm_eff, D), lambda i: (i, 0)),   # x row tile
                pl.BlockSpec((1, D), lambda i: (0, 0)),        # w row (resident)
                pl.BlockSpec((1, D), lambda i: (0, 0)),        # v row (resident)
                pl.BlockSpec(memory_space=pltpu.MemorySpace.SMEM),  # bias scalar
            ],
            out_specs=pl.BlockSpec((tm_eff, D), lambda i: (i, 0)),
        ),
        compiler_params=pltpu.CompilerParams(
            dimension_semantics=("parallel",)),
        cost_estimate=cost,
    )(x2d, w_row, v_row, b_arr)

    return out.reshape(orig_shape)


if __name__ == "__main__":
    # Module config: input_size=32 (dropout arg is unused by the forward pass).
    D = 32
    BATCH, SEQ = 2, 8

    key = jax.random.PRNGKey(0)
    kx, kv, kw, kb = jax.random.split(key, 4)

    x = jax.random.normal(kx, (BATCH, SEQ, D), dtype=jnp.float32)

    # Parameters. (PyTorch inits adapter_vector to ones; use random values so
    # the elementwise-vector path is genuinely exercised.)
    adapter_vector = jax.random.normal(kv, (D,), dtype=jnp.float32)
    alpha_weight = jax.random.normal(kw, (1, D), dtype=jnp.float32) * (1.0 / jnp.sqrt(D))
    alpha_bias = jax.random.normal(kb, (1,), dtype=jnp.float32) * 0.1

    out = adapter_bias_forward(x, adapter_vector, alpha_weight, alpha_bias)
    out = jax.block_until_ready(out)

    # Pure-JAX reference of the exact module forward.
    ref = adapter_vector * (x @ alpha_weight.T + alpha_bias)
    assert out.shape == x.shape
    assert jnp.allclose(out, ref, atol=1e-4, rtol=1e-4), "mismatch vs reference"

    print("KERNEL_OK")
</pallas_src>

<mosaic_0001>
module attributes {stable_mosaic.version = 11 : i64} {
  func.func @_adapter_bias_kernel(%arg0: i32, %arg1: memref<8x32xf32, #tpu.memory_space<vmem>>, %arg2: memref<1x32xf32, #tpu.memory_space<vmem>>, %arg3: memref<1x32xf32, #tpu.memory_space<vmem>>, %arg4: memref<1x1xf32, #tpu.memory_space<smem>>, %arg5: memref<8x32xf32, #tpu.memory_space<vmem>>) attributes {dimension_semantics = [#tpu.dimension_semantics<parallel>], iteration_bounds = array<i64: 2>, scalar_prefetch = 0 : i64, scratch_operands = 0 : i64, tpu.core_type = #tpu.core_type<tc>, window_params = [{transform_indices = @transform_0, window_bounds = array<i64: 8, 32>}, {pipeline_mode = #tpu.pipeline_mode<synchronous>, transform_indices = @transform_1, window_bounds = array<i64: 1, 32>}, {pipeline_mode = #tpu.pipeline_mode<synchronous>, transform_indices = @transform_2, window_bounds = array<i64: 1, 32>}, {transform_indices = @transform_3, window_bounds = array<i64: 1, 1>}, {transform_indices = @transform_4, window_bounds = array<i64: 8, 32>}]} {
    %c0 = arith.constant 0 : index
    %c0_0 = arith.constant 0 : index
    %0 = vector.load %arg1[%c0, %c0_0] : memref<8x32xf32, #tpu.memory_space<vmem>>, vector<8x32xf32>
    %c0_1 = arith.constant 0 : index
    %c0_2 = arith.constant 0 : index
    %1 = vector.load %arg2[%c0_1, %c0_2] : memref<1x32xf32, #tpu.memory_space<vmem>>, vector<1x32xf32>
    %c0_3 = arith.constant 0 : index
    %c0_4 = arith.constant 0 : index
    %2 = vector.load %arg3[%c0_3, %c0_4] : memref<1x32xf32, #tpu.memory_space<vmem>>, vector<1x32xf32>
    %c0_5 = arith.constant 0 : index
    %c0_6 = arith.constant 0 : index
    %3 = memref.load %arg4[%c0_5, %c0_6] : memref<1x1xf32, #tpu.memory_space<smem>>
    %4 = vector.broadcast %1 : vector<1x32xf32> to vector<8x32xf32>
    %5 = arith.mulf %0, %4 : vector<8x32xf32>
    %cst = arith.constant dense<0.000000e+00> : vector<8xf32>
    %6 = vector.multi_reduction <add>, %5, %cst [1] : vector<8x32xf32> to vector<8xf32>
    %7 = vector.shape_cast %6 : vector<8xf32> to vector<8x1xf32>
    %8 = vector.broadcast %3 : f32 to vector<8x1xf32>
    %9 = arith.addf %7, %8 : vector<8x1xf32>
    %10 = vector.broadcast %9 : vector<8x1xf32> to vector<8x32xf32>
    %11 = vector.broadcast %2 : vector<1x32xf32> to vector<8x32xf32>
    %12 = arith.mulf %10, %11 : vector<8x32xf32>
    %c0_7 = arith.constant 0 : index
    %c0_8 = arith.constant 0 : index
    %13 = vector.load %arg5[%c0_7, %c0_8] : memref<8x32xf32, #tpu.memory_space<vmem>>, vector<8x32xf32>
    tpu.vector_store %arg5[%c0_7, %c0_8], %12 {strides = array<i32>} : memref<8x32xf32, #tpu.memory_space<vmem>>, vector<8x32xf32>,
    return
  }
  func.func @transform_0(%arg0: i32) -> (i32, i32) {
    %c0_i32 = arith.constant 0 : i32
    %c0_i32_0 = arith.constant 0 : i32
    return %arg0, %c0_i32 : i32, i32
  }
  func.func @transform_1(%arg0: i32) -> (i32, i32) {
    %c0_i32 = arith.constant 0 : i32
    %c0_i32_0 = arith.constant 0 : i32
    %c0_i32_1 = arith.constant 0 : i32
    return %c0_i32, %c0_i32_0 : i32, i32
  }
  func.func @transform_2(%arg0: i32) -> (i32, i32) {
    %c0_i32 = arith.constant 0 : i32
    %c0_i32_0 = arith.constant 0 : i32
    %c0_i32_1 = arith.constant 0 : i32
    return %c0_i32, %c0_i32_0 : i32, i32
  }
  func.func @transform_3(%arg0: i32) -> (i32, i32) {
    %c0_i32 = arith.constant 0 : i32
    %c0_i32_0 = arith.constant 0 : i32
    %c0_i32_1 = arith.constant 0 : i32
    return %c0_i32, %c0_i32_0 : i32, i32
  }
  func.func @transform_4(%arg0: i32) -> (i32, i32) {
    %c0_i32 = arith.constant 0 : i32
    %c0_i32_0 = arith.constant 0 : i32
    return %arg0, %c0_i32 : i32, i32
  }
}

</mosaic_0001>

<llo_original>
// kernel: tpu_custom_call.1
$region0: #{tpu_custom_call.1}
  #allocation0 [shape = 'u32[]', space=smem, size = 0x4, offset = 0x4, fixed_abs, tag = 'smem constant byte address 0x4 - core index']
  #allocation1 [shape = 'u32[144,128]{1,0:T(1,128)}', space=vmem, size = 0x12000, scoped, tag = 'internal scratch']
  #allocation2 [shape = 'f32[1,1]{1,0:T(1,128)S(6)}', space=smem, size = 0x200, scoped, tag = 'scoped memory for tpu_custom_call.1']
  %s0 = inlined_call_operand.hbm [shape: f32[16,32], index: 0, kind: input, shape index: {}]
  %s1 = inlined_call_operand.vmem [shape: f32[1,32], index: 1, kind: input, shape index: {}]
  %s2 = inlined_call_operand.vmem [shape: f32[1,32], index: 2, kind: input, shape index: {}]
  %s3 = inlined_call_operand.<no memory space> [shape: f32[1,1], index: 3, kind: input, shape index: {}]
  %s4 = inlined_call_operand.hbm [shape: f32[16,32], index: 4, kind: output, shape index: {}]
  %s5 = sld [smem:[#allocation0]]
  $region53: #{tpu_custom_call.1} parent=0
    _
  %s7 = ssub.s32 1, %s5
  %s8 = scalar_select 0, %s7, %s5
  %9 = sst [smem:[#allocation2]] %s3
  $region1: #{tpu_custom_call.1} parent=0
    #allocation3 [shape = 'u8[8192]{0}', space=vmem, size = 0x2000, scoped, tag = 'input window, operand 0']
    #allocation4 [shape = 's32[2]{0}', space=sflag, size = 0x8, scoped, tag = 'scoped memory for tpu_custom_call.1']
    #allocation5 [shape = 's32[2]{0}', space=sflag, size = 0x8, scoped, tag = 'scoped memory for tpu_custom_call.1']
    #allocation6 [shape = 'u8[8192]{0}', space=vmem, size = 0x2000, scoped, tag = 'output window, operand 0']
    %10 = vsyncpa [#allocation4], 0
    %s11 = scalar_lea.sflag [#allocation4], 1
    %12 = vsyncpa %s11, 0
    %13 = vsyncpa [#allocation5], 0
    %s14 = scalar_lea.sflag [#allocation5], 1
    %15 = vsyncpa %s14, 0
    loop: start=0, step=1, limit=4
    $region2: #{tpu_custom_call.1} parent=1 // loop_pre_header
      _
    $region3: #{tpu_custom_call.1} parent=1 // loop_header
      %s17 = sphi 0, %s21
      %p18 = scmp.ge.s32.totalorder %s17, 4
      %s27 = sphi 0, %s29
      %s30 = sphi 0, %s27
      %s31 = sphi 0, %s30
      %s47 = sphi 0, %s31
      %s51 = sphi 0, %s51
      %s53 = sphi 0, %s51
      %s54 = sphi 0, %s53
      %s68 = sphi 0, %s54
      %s72 = sphi 0, %s72
      %s74 = sphi 0, %s72
      %s75 = sphi 0, %s74
      %s89 = sphi 0, %s75
      %s93 = sphi 0, %s93
      %s95 = sphi 0, %s93
      %s96 = sphi 0, %s95
      %s110 = sphi 0, %s96
      %s116 = sphi 0, %s118
      %s119 = sphi 0, %s116
      %s120 = sphi 0, %s119
      %s136 = sphi 0, %s120
    $region4: #{tpu_custom_call.1} parent=1 // loop_header_branch
      %20 = sbr.rel (%p18) target = $region8
    $region5: #{tpu_custom_call.1} parent=1 // loop_body
      %s22 = ssub.s32 %s17, 1
      %s23 = ssub.s32 %s17, 2
      %s24 = sadd.s32 %s17, 1
      %s25 = ssub.s32 %s17, %s24
      %p26 = scmp.eq.s32.totalorder %s25, 0
      %s28 = sadd.s32 %s27, 1
      %s29 = scalar_select %p26, %s27, %s28
      %p32 = pneg %p26
      %p33 = scmp.eq.s32.totalorder %s17, 1
      %p34 = por %p32, %p33
      %p35 = scmp.ne.s32.totalorder %s27, %s30
      %p36 = scmp.eq.s32.totalorder %s17, 0
      %p37 = por %p35, %p36
      %p38 = scmp.ne.s32.totalorder %s27, %s30
      %p39 = scmp.eq.s32.totalorder %s22, 1
      %p40 = por %p38, %p39
      %p41 = scmp.ne.s32.totalorder %s30, %s31
      %p42 = scmp.eq.s32.totalorder %s22, 0
      %p43 = por %p41, %p42
      %p44 = scmp.ne.s32.totalorder %s30, %s31
      %p45 = scmp.eq.s32.totalorder %s23, 1
      %p46 = por %p44, %p45
      %p48 = scmp.ne.s32.totalorder %s31, %s47
      %p49 = scmp.eq.s32.totalorder %s23, 0
      %p50 = por %p48, %p49
      %s52 = sadd.s32 %s51, 1
      %p55 = scmp.eq.s32.totalorder %s17, 1
      %p56 = scmp.ne.s32.totalorder %s51, %s53
      %p57 = scmp.eq.s32.totalorder %s17, 0
      %p58 = por %p56, %p57
      %p59 = scmp.ne.s32.totalorder %s51, %s53
      %p60 = scmp.eq.s32.totalorder %s22, 1
      %p61 = por %p59, %p60
      %p62 = scmp.ne.s32.totalorder %s53, %s54
      %p63 = scmp.eq.s32.totalorder %s22, 0
      %p64 = por %p62, %p63
      %p65 = scmp.ne.s32.totalorder %s53, %s54
      %p66 = scmp.eq.s32.totalorder %s23, 1
      %p67 = por %p65, %p66
      %p69 = scmp.ne.s32.totalorder %s54, %s68
      %p70 = scmp.eq.s32.totalorder %s23, 0
      %p71 = por %p69, %p70
      %s73 = sadd.s32 %s72, 1
      %p76 = scmp.eq.s32.totalorder %s17, 1
      %p77 = scmp.ne.s32.totalorder %s72, %s74
      %p78 = scmp.eq.s32.totalorder %s17, 0
      %p79 = por %p77, %p78
      %p80 = scmp.ne.s32.totalorder %s72, %s74
      %p81 = scmp.eq.s32.totalorder %s22, 1
      %p82 = por %p80, %p81
      %p83 = scmp.ne.s32.totalorder %s74, %s75
      %p84 = scmp.eq.s32.totalorder %s22, 0
      %p85 = por %p83, %p84
      %p86 = scmp.ne.s32.totalorder %s74, %s75
      %p87 = scmp.eq.s32.totalorder %s23, 1
      %p88 = por %p86, %p87
      %p90 = scmp.ne.s32.totalorder %s75, %s89
      %p91 = scmp.eq.s32.totalorder %s23, 0
      %p92 = por %p90, %p91
      %s94 = sadd.s32 %s93, 1
      %p97 = scmp.eq.s32.totalorder %s17, 1
      %p98 = scmp.ne.s32.totalorder %s93, %s95
      %p99 = scmp.eq.s32.totalorder %s17, 0
      %p100 = por %p98, %p99
      %p101 = scmp.ne.s32.totalorder %s93, %s95
      %p102 = scmp.eq.s32.totalorder %s22, 1
      %p103 = por %p101, %p102
      %p104 = scmp.ne.s32.totalorder %s95, %s96
      %p105 = scmp.eq.s32.totalorder %s22, 0
      %p106 = por %p104, %p105
      %p107 = scmp.ne.s32.totalorder %s95, %s96
      %p108 = scmp.eq.s32.totalorder %s23, 1
      %p109 = por %p107, %p108
      %p111 = scmp.ne.s32.totalorder %s96, %s110
      %p112 = scmp.eq.s32.totalorder %s23, 0
      %p113 = por %p111, %p112
      %s114 = ssub.s32 %s17, %s24
      %p115 = scmp.eq.s32.totalorder %s114, 0
      %s117 = sadd.s32 %s116, 1
      %s118 = scalar_select %p115, %s116, %s117
      %p121 = pneg %p115
      %p122 = scmp.eq.s32.totalorder %s17, 1
      %p123 = por %p121, %p122
      %p124 = scmp.ne.s32.totalorder %s116, %s119
      %p125 = scmp.eq.s32.totalorder %s17, 0
      %p126 = por %p124, %p125
      %p127 = scmp.ne.s32.totalorder %s116, %s119
      %p128 = scmp.eq.s32.totalorder %s22, 1
      %p129 = por %p127, %p128
      %p130 = scmp.ne.s32.totalorder %s119, %s120
      %p131 = scmp.eq.s32.totalorder %s22, 0
      %p132 = por %p130, %p131
      %p133 = scmp.ne.s32.totalorder %s119, %s120
      %p134 = scmp.eq.s32.totalorder %s23, 1
      %p135 = por %p133, %p134
      %p137 = scmp.ne.s32.totalorder %s120, %s136
      %p138 = scmp.eq.s32.totalorder %s23, 0
      %p139 = por %p137, %p138
      %p140 = scmp.le.s32.totalorder 1, %s17
      %p141 = scmp.lt.s32.totalorder %s17, 3
      %p142 = pnand %p140, %p141
      %p143 = pneg %p142
      // Predicated region
      $region9: #{tpu_custom_call.1} parent=5 // pred_check
        _
      $region10: #{tpu_custom_call.1} parent=5 // pred_check_branch
        %145 = sbr.rel (%p142) target = $region12
      $region11: #{tpu_custom_call.1} parent=5 // pred_region
        %s146 = ssub.s32 %s17, 1
        // Predicated region
        $region13: #{tpu_custom_call.1} parent=11 // pred_check
          %p147 = pneg %p64
        $region14: #{tpu_custom_call.1} parent=11 // pred_check_branch
          %149 = sbr.rel (%p147) target = $region16
        $region15: #{tpu_custom_call.1} parent=11 // pred_region
          _
        $region16: #{tpu_custom_call.1} parent=11 // pred_fallthru
          _
        // Predicated region
        $region17: #{tpu_custom_call.1} parent=11 // pred_check
          %p150 = pneg %p85
        $region18: #{tpu_custom_call.1} parent=11 // pred_check_branch
          %152 = sbr.rel (%p150) target = $region20
        $region19: #{tpu_custom_call.1} parent=11 // pred_region
          _
        $region20: #{tpu_custom_call.1} parent=11 // pred_fallthru
          _
        // Predicated region
        $region21: #{tpu_custom_call.1} parent=11 // pred_check
          %p153 = pneg %p106
        $region22: #{tpu_custom_call.1} parent=11 // pred_check_branch
          %155 = sbr.rel (%p153) target = $region24
        $region23: #{tpu_custom_call.1} parent=11 // pred_region
          _
        $region24: #{tpu_custom_call.1} parent=11 // pred_fallthru
          _
      $region12: #{tpu_custom_call.1} parent=5 // pred_fallthru
        _
      %p156 = scmp.lt.s32.totalorder %s17, 2
      // Predicated region
      $region25: #{tpu_custom_call.1} parent=5 // pred_check
        %p157 = pneg %p156
      $region26: #{tpu_custom_call.1} parent=5 // pred_check_branch
        %159 = sbr.rel (%p157) target = $region28
      $region27: #{tpu_custom_call.1} parent=5 // pred_region
        // Predicated region
        $region29: #{tpu_custom_call.1} parent=27 // pred_check
          %p160 = pneg %p37
        $region30: #{tpu_custom_call.1} parent=27 // pred_check_branch
          %162 = sbr.rel (%p160) target = $region32
        $region31: #{tpu_custom_call.1} parent=27 // pred_region
          %s163 = sand.u32 %s27, 1
          %s164 = scalar_lea.sflag [#allocation4], %s163
          %s165 = sand.u32 %s27, 1
          %s166 = smul.addr %s165, 8
          %s167 = scalar_lea.vmem [#allocation3], %s166
          %s169 = ssub.s32 128, 128
          %170 = vsyncadd %s164, %s169
          %s171 = smul.addr %s17, 128
          %s172 = scalar_lea.hbm %s0, %s171
          %s174 = sshll.u32 %s167, 4
          %s175 = int_to_ptr.vmem [resolvable:$true] %s174
          %177 = dma.hbm_to_vmem [thread:$0]  %s172, 128, %s175, %s164
        $region32: #{tpu_custom_call.1} parent=27 // pred_fallthru
          _
      $region28: #{tpu_custom_call.1} parent=5 // pred_fallthru
        _
      %p178 = scmp.le.s32.totalorder 1, %s17
      %p179 = scmp.lt.s32.totalorder %s17, 3
      %p180 = pnand %p178, %p179
      %p181 = pneg %p180
      // Predicated region
      $region33: #{tpu_custom_call.1} parent=5 // pred_check
        _
      $region34: #{tpu_custom_call.1} parent=5 // pred_check_branch
        %183 = sbr.rel (%p180) target = $region36
      $region35: #{tpu_custom_call.1} parent=5 // pred_region
        %s184 = ssub.s32 %s17, 1
        %s185 = sand.u32 %s30, 1
        %s186 = scalar_lea.sflag [#allocation4], %s185
        %s187 = sand.u32 %s30, 1
        %s188 = smul.addr %s187, 8
        %s189 = scalar_lea.vmem [#allocation3], %s188
        // Predicated region
        $region37: #{tpu_custom_call.1} parent=35 // pred_check
          %p190 = pneg %p43
        $region38: #{tpu_custom_call.1} parent=35 // pred_check_branch
          %192 = sbr.rel (%p190) target = $region40
        $region39: #{tpu_custom_call.1} parent=35 // pred_region
          %193 = dma.done %s186, 128
        $region40: #{tpu_custom_call.1} parent=35 // pred_fallthru
          _
        %s194 = sand.u32 %s30, 1
        %s195 = scalar_lea.sflag [#allocation4], %s194
        %s196 = sand.u32 %s30, 1
        %s197 = smul.addr %s196, 8
        %s198 = scalar_lea.vmem [#allocation3], %s197
        %p199 = pneg %p43
        %p200 = pneg %p40
        %p201 = pneg %p64
        %p202 = pneg %p61
        %p203 = pneg %p85
        %p204 = pneg %p82
        %p205 = pneg %p106
        %p206 = pneg %p103
        %p207 = pneg %p132
        %p208 = pneg %p129
        %s209 = sand.u32 %s119, 1
        %s210 = scalar_lea.sflag [#allocation5], %s209
        %s211 = sand.u32 %s119, 1
        %s212 = smul.addr %s211, 8
        %s213 = scalar_lea.vmem [#allocation6], %s212
        %v214 = vld [vmem:[%s189] sm:$0xff]
        %v215 = vld [vmem:[%s1] sm:$0x1]
        %v216 = vld [vmem:[%s2] sm:$0x1]
        %s217 = sld [smem:[#allocation2]]
        %v219 = vlaneseq
        %v220 = vshrl.u32 %v219, 7
        %v221 = vsub.s32 0, %v220
        %v222 = vrot.slane %v215, %v221
        %v224 = vmul.f32 %v214, %v222
        %vm225 = vcmask 261120
        %v226 = vsel %vm225, %v224, 0.0
        %227 = vadd.xlane.f32.xlu0 %v226
        %v228 = vpop.xlane.xlu0 %227
        %v229 = vstv %s217
        %v230 = vadd.f32 %v228, %v229
        %v232 = vlaneseq
        %v233 = vshrl.u32 %v232, 7
        %v234 = vsub.s32 0, %v233
        %v235 = vrot.slane %v216, %v234
        %v237 = vmul.f32 %v230, %v235
        %238 = vst.msk [vmem:[%s213] sm:$0xff] %vm225, %v237
        %s239 = sand.u32 %s119, 1
        %s240 = scalar_lea.sflag [#allocation5], %s239
        %s241 = sand.u32 %s119, 1
        %s242 = smul.addr %s241, 8
        %s243 = scalar_lea.vmem [#allocation6], %s242
        // Predicated region
        $region41: #{tpu_custom_call.1} parent=35 // pred_check
          %p244 = pneg %p129
        $region42: #{tpu_custom_call.1} parent=35 // pred_check_branch
          %246 = sbr.rel (%p244) target = $region44
        $region43: #{tpu_custom_call.1} parent=35 // pred_region
          %s248 = ssub.s32 128, 128
          %249 = vsyncadd %s240, %s248
          %s250 = smul.addr %s22, 128
          %s251 = scalar_lea.hbm %s4, %s250
          %s253 = sshll.u32 %s243, 4
          %s254 = int_to_ptr.vmem [resolvable:$true] %s253
          %256 = dma.vmem_to_hbm [thread:$0]  %s254, 128, %s251, %s240
        $region44: #{tpu_custom_call.1} parent=35 // pred_fallthru
          _
      $region36: #{tpu_custom_call.1} parent=5 // pred_fallthru
        _
      %p257 = scmp.le.s32.totalorder 2, %s17
      // Predicated region
      $region45: #{tpu_custom_call.1} parent=5 // pred_check
        %p258 = pneg %p257
      $region46: #{tpu_custom_call.1} parent=5 // pred_check_branch
        %260 = sbr.rel (%p258) target = $region48
      $region47: #{tpu_custom_call.1} parent=5 // pred_region
        %s261 = ssub.s32 %s17, 2
        // Predicated region
        $region49: #{tpu_custom_call.1} parent=47 // pred_check
          %p262 = pneg %p135
        $region50: #{tpu_custom_call.1} parent=47 // pred_check_branch
          %264 = sbr.rel (%p262) target = $region52
        $region51: #{tpu_custom_call.1} parent=47 // pred_region
          %s265 = sand.u32 %s120, 1
          %s266 = scalar_lea.sflag [#allocation5], %s265
          %s267 = sand.u32 %s120, 1
          %s268 = smul.addr %s267, 8
          %s269 = scalar_lea.vmem [#allocation6], %s268
          %270 = dma.done %s266, 128
        $region52: #{tpu_custom_call.1} parent=47 // pred_fallthru
          _
      $region48: #{tpu_custom_call.1} parent=5 // pred_fallthru
        _
    $region6: #{tpu_custom_call.1} parent=1 // loop_footer
      %s21 = sadd.s32 1, %s17
    $region7: #{tpu_custom_call.1} parent=1 // loop_footer_branch
      %16 = sbr.rel target = $region3
    $region8: #{tpu_custom_call.1} parent=1 // loop_exit
      _
    %271 = vsyncpa [#allocation4], 1
    %s272 = scalar_lea.sflag [#allocation4], 1
    %273 = vsyncpa %s272, 1
    %274 = vsyncpa [#allocation5], 1
    %s275 = scalar_lea.sflag [#allocation5], 1
    %276 = vsyncpa %s275, 1

</llo_original>
